<compile_context>
chip_gen: v5e
topology: v5e:2x2
jax: 0.10.0
libtpu: 0.0.40
codegen_flags: <defaults>
</compile_context>

<pallas_src>
import functools

import jax
import jax.numpy as jnp
from jax.experimental import pallas as pl
from jax.experimental.pallas import tpu as pltpu

# Target bytes per x block (~2 MiB): 2x-double-buffered input + output =
# ~8 MiB of VMEM, safe under every generation's scoped-VMEM default
# (v5e 16 MiB, v6e/v7x 32 MiB), so no vmem_limit_bytes override is needed.
_TARGET_BLOCK_BYTES = 2 * 1024 * 1024


def _se_kernel(w_ref, x_ref, o_ref, *, hw, cr):
    # w_ref: VMEM (C, 2*Cr)      -- [fc1^T | fc2] packed, f32, grid-resident
    # x_ref: VMEM (Bblk, C, HWp) -- batch block, spatial in lanes (zero-padded)
    # o_ref: VMEM (Bblk, C, HWp)
    x = x_ref[...]                                    # native dtype
    w = w_ref[...]                                    # f32 already (no cast)
    w1t = w[:, :cr]                                   # (C, Cr) = fc1 weight^T
    w2 = w[:, cr:]                                    # (C, Cr) = fc2 weight

    # Squeeze: average pool over the (zero-padded) lane axis, f32 accumulation.
    # Padded lanes are zero, so summing over HWp and dividing by the true HW
    # gives the exact mean.
    p = jnp.sum(x, axis=-1, keepdims=True, dtype=jnp.float32) * (1.0 / hw)  # (Bblk, C, 1)

    # Excite: fc1 -> ReLU -> fc2 -> sigmoid as broadcast-mul + reduce (VPU/XLU;
    # Cr is tiny so this rides in otherwise-idle slots — no MXU).
    h = jnp.sum(p * w1t[None, :, :], axis=1)                   # (Bblk, Cr) = p @ fc1^T
    h = jnp.maximum(h, 0.0)                                     # ReLU
    y = jnp.sum(w2[None, :, :] * h[:, None, :], axis=-1)       # (Bblk, C)  = h @ fc2^T
    scale = jax.nn.sigmoid(y)[..., None].astype(x.dtype)       # (Bblk, C, 1)

    # Channel-wise rescale, broadcast along the lane (spatial) axis.
    o_ref[...] = x * scale


@jax.jit
def se_layer(x, w1, w2):
    """SELayer forward.

    x : (B, C, H, W)
    w1: (Cr, C)  -- fc[0] weight (Linear(C -> Cr), no bias)
    w2: (C, Cr)  -- fc[2] weight (Linear(Cr -> C), no bias)
    returns x * sigmoid(fc2(relu(fc1(avgpool(x)))))
    """
    B, C, H, W = x.shape
    HW = H * W
    Cr = w1.shape[0]

    # Lane-dense layout with a multiple-of-128 guard for real SE spatial sizes
    # (7x7, 14x14, ...): pad the flattened spatial axis with zeros.
    HWp = ((HW + 127) // 128) * 128
    x2 = x.reshape(B, C, HW)
    if HWp != HW:
        x2 = jnp.pad(x2, ((0, 0), (0, 0), (0, HWp - HW)))

    # Pre-pack + pre-cast the tiny FC weights into one resident VMEM block.
    w_packed = jnp.concatenate([jnp.transpose(w1), w2], axis=1).astype(jnp.float32)

    # Batch-block so each x block is ~_TARGET_BLOCK_BYTES (amortizes the
    # ~0.35 us per-grid-step overhead; the op is pure HBM streaming).
    per_batch_bytes = C * HWp * x.dtype.itemsize
    b_blk = max(1, min(B, _TARGET_BLOCK_BYTES // max(per_batch_bytes, 1)))
    grid = (pl.cdiv(B, b_blk),)

    kernel = functools.partial(_se_kernel, hw=HW, cr=Cr)

    out = pl.pallas_call(
        kernel,
        out_shape=jax.ShapeDtypeStruct((B, C, HWp), x.dtype),
        grid=grid,
        in_specs=[
            pl.BlockSpec((C, 2 * Cr), lambda b: (0, 0)),          # packed weights, resident
            pl.BlockSpec((b_blk, C, HWp), lambda b: (b, 0, 0)),   # x batch block
        ],
        out_specs=pl.BlockSpec((b_blk, C, HWp), lambda b: (b, 0, 0)),
        compiler_params=pltpu.CompilerParams(
            dimension_semantics=("parallel",)),
    )(w_packed, x2)

    if HWp != HW:
        out = out[:, :, :HW]
    return out.reshape(B, C, H, W)


if __name__ == "__main__":
    key = jax.random.PRNGKey(0)
    kx, k1, k2 = jax.random.split(key, 3)

    # SELayer(channel=32, reduction=16) -> hidden = int(32 / 16) = 2.
    # (channels=4 with the module's default reduction=16 would give a 0-wide
    #  hidden layer, so we use the smallest non-degenerate channel count.)
    B, C, H, W = 2, 32, 16, 16
    reduction = 16
    Cr = int(C / reduction)

    x = jax.random.normal(kx, (B, C, H, W), dtype=jnp.float32)

    # PyTorch nn.Linear default init: U(-1/sqrt(fan_in), 1/sqrt(fan_in)), no bias.
    b1 = 1.0 / (C ** 0.5)
    b2 = 1.0 / (Cr ** 0.5)
    w1 = jax.random.uniform(k1, (Cr, C), jnp.float32, -b1, b1)   # fc1: C  -> Cr
    w2 = jax.random.uniform(k2, (C, Cr), jnp.float32, -b2, b2)   # fc2: Cr -> C

    out = se_layer(x, w1, w2)
    jax.block_until_ready(out)

    # Pure-JAX reference (matches the PyTorch forward).
    p = jnp.mean(x, axis=(2, 3))                    # (B, C)
    h = jnp.maximum(p @ w1.T, 0.0)                  # (B, Cr)
    y = h @ w2.T                                    # (B, C)
    s = jax.nn.sigmoid(y)[:, :, None, None]         # (B, C, 1, 1)
    ref = x * s

    assert out.shape == (B, C, H, W), out.shape
    assert jnp.allclose(out, ref, atol=1e-5, rtol=1e-5), float(
        jnp.max(jnp.abs(out - ref)))
    print("KERNEL_OK")
</pallas_src>

<mosaic_0001>
module attributes {stable_mosaic.version = 11 : i64} {
  func.func @_se_kernel(%arg0: i32, %arg1: memref<32x4xf32, #tpu.memory_space<vmem>>, %arg2: memref<2x32x256xf32, #tpu.memory_space<vmem>>, %arg3: memref<2x32x256xf32, #tpu.memory_space<vmem>>) attributes {dimension_semantics = [#tpu.dimension_semantics<parallel>], iteration_bounds = array<i64: 1>, scalar_prefetch = 0 : i64, scratch_operands = 0 : i64, tpu.core_type = #tpu.core_type<tc>, window_params = [{pipeline_mode = #tpu.pipeline_mode<synchronous>, transform_indices = @transform_0, window_bounds = array<i64: 32, 4>}, {transform_indices = @transform_1, window_bounds = array<i64: 2, 32, 256>}, {transform_indices = @transform_2, window_bounds = array<i64: 2, 32, 256>}]} {
    %c0 = arith.constant 0 : index
    %c0_0 = arith.constant 0 : index
    %c0_1 = arith.constant 0 : index
    %0 = vector.load %arg2[%c0, %c0_0, %c0_1] : memref<2x32x256xf32, #tpu.memory_space<vmem>>, vector<2x32x256xf32>
    %c0_2 = arith.constant 0 : index
    %c0_3 = arith.constant 0 : index
    %1 = vector.load %arg1[%c0_2, %c0_3] : memref<32x4xf32, #tpu.memory_space<vmem>>, vector<32x4xf32>
    %2 = vector.extract_strided_slice %1 {offsets = [0, 0], sizes = [32, 2], strides = [1, 1]} : vector<32x4xf32> to vector<32x2xf32>
    %3 = vector.extract_strided_slice %1 {offsets = [0, 2], sizes = [32, 2], strides = [1, 1]} : vector<32x4xf32> to vector<32x2xf32>
    %cst = arith.constant dense<0.000000e+00> : vector<2x32xf32>
    %4 = vector.multi_reduction <add>, %0, %cst [2] : vector<2x32x256xf32> to vector<2x32xf32>
    %5 = vector.shape_cast %4 : vector<2x32xf32> to vector<2x32x1xf32>
    %cst_4 = arith.constant 3.906250e-03 : f32
    %6 = vector.broadcast %cst_4 : f32 to vector<2x32x1xf32>
    %7 = arith.mulf %5, %6 : vector<2x32x1xf32>
    %8 = vector.shape_cast %2 : vector<32x2xf32> to vector<1x32x2xf32>
    %9 = vector.broadcast %7 : vector<2x32x1xf32> to vector<2x32x2xf32>
    %10 = vector.broadcast %8 : vector<1x32x2xf32> to vector<2x32x2xf32>
    %11 = arith.mulf %9, %10 : vector<2x32x2xf32>
    %cst_5 = arith.constant dense<0.000000e+00> : vector<2x2xf32>
    %12 = vector.multi_reduction <add>, %11, %cst_5 [1] : vector<2x32x2xf32> to vector<2x2xf32>
    %cst_6 = arith.constant 0.000000e+00 : f32
    %13 = vector.broadcast %cst_6 : f32 to vector<2x2xf32>
    %14 = arith.maximumf %12, %13 : vector<2x2xf32>
    %15 = vector.shape_cast %3 : vector<32x2xf32> to vector<1x32x2xf32>
    %16 = vector.shape_cast %14 : vector<2x2xf32> to vector<2x1x2xf32>
    %17 = vector.broadcast %15 : vector<1x32x2xf32> to vector<2x32x2xf32>
    %18 = vector.broadcast %16 : vector<2x1x2xf32> to vector<2x32x2xf32>
    %19 = arith.mulf %17, %18 : vector<2x32x2xf32>
    %cst_7 = arith.constant dense<0.000000e+00> : vector<2x32xf32>
    %20 = vector.multi_reduction <add>, %19, %cst_7 [2] : vector<2x32x2xf32> to vector<2x32xf32>
    %21 = arith.negf %20 : vector<2x32xf32>
    %22 = math.exp %21 : vector<2x32xf32>
    %cst_8 = arith.constant 1.000000e+00 : f32
    %23 = vector.broadcast %cst_8 : f32 to vector<2x32xf32>
    %24 = arith.addf %23, %22 : vector<2x32xf32>
    %25 = arith.divf %23, %24 : vector<2x32xf32>
    %26 = vector.shape_cast %25 : vector<2x32xf32> to vector<2x32x1xf32>
    %27 = vector.broadcast %26 : vector<2x32x1xf32> to vector<2x32x256xf32>
    %28 = arith.mulf %0, %27 : vector<2x32x256xf32>
    %c0_9 = arith.constant 0 : index
    %c0_10 = arith.constant 0 : index
    %c0_11 = arith.constant 0 : index
    %29 = vector.load %arg3[%c0_9, %c0_10, %c0_11] : memref<2x32x256xf32, #tpu.memory_space<vmem>>, vector<2x32x256xf32>
    tpu.vector_store %arg3[%c0_9, %c0_10, %c0_11], %28 {strides = array<i32>} : memref<2x32x256xf32, #tpu.memory_space<vmem>>, vector<2x32x256xf32>,
    return
  }
  func.func @transform_0(%arg0: i32) -> (i32, i32) {
    %c0_i32 = arith.constant 0 : i32
    %c0_i32_0 = arith.constant 0 : i32
    %c0_i32_1 = arith.constant 0 : i32
    return %c0_i32, %c0_i32_0 : i32, i32
  }
  func.func @transform_1(%arg0: i32) -> (i32, i32, i32) {
    %c0_i32 = arith.constant 0 : i32
    %c0_i32_0 = arith.constant 0 : i32
    %c0_i32_1 = arith.constant 0 : i32
    return %arg0, %c0_i32, %c0_i32_0 : i32, i32, i32
  }
  func.func @transform_2(%arg0: i32) -> (i32, i32, i32) {
    %c0_i32 = arith.constant 0 : i32
    %c0_i32_0 = arith.constant 0 : i32
    %c0_i32_1 = arith.constant 0 : i32
    return %arg0, %c0_i32, %c0_i32_0 : i32, i32, i32
  }
}

</mosaic_0001>

<llo_original>
// kernel: se_layer.1
$region0: #{se_layer.1}
  #allocation0 [shape = 'u32[]', space=smem, size = 0x4, offset = 0x4, fixed_abs, tag = 'smem constant byte address 0x4 - core index']
  #allocation1 [shape = 'u32[72,128]{1,0:T(1,128)}', space=vmem, size = 0x9000, scoped, tag = 'internal scratch']
  %s0 = inlined_call_operand.vmem [shape: f32[32,4], index: 0, kind: input, shape index: {}]
  %s1 = inlined_call_operand.vmem [shape: f32[2,32,256], index: 1, kind: input, shape index: {}]
  %s2 = inlined_call_operand.vmem [shape: f32[2,32,256], index: 2, kind: output, shape index: {}]
  %s3 = sld [smem:[#allocation0]]
  $region18: #{se_layer.1} parent=0
    _
  %s5 = ssub.s32 1, %s3
  %s6 = scalar_select 0, %s5, %s3
  // Predicated region
  $region2: #{se_layer.1} parent=0 // pred_check
    _
  $region3: #{se_layer.1} parent=0 // pred_check_branch
    %8 = sbr.rel (0) target = $region5
  $region4: #{se_layer.1} parent=0 // pred_region
    _
  $region5: #{se_layer.1} parent=0 // pred_fallthru
    _
  // Predicated region
  $region6: #{se_layer.1} parent=0 // pred_check
    _
  $region7: #{se_layer.1} parent=0 // pred_check_branch
    %10 = sbr.rel (0) target = $region9
  $region8: #{se_layer.1} parent=0 // pred_region
    _
  $region9: #{se_layer.1} parent=0 // pred_fallthru
    _
  %v11 = vld [vmem:[%s1] sm:$0xff]
  %v12 = vld [vmem:[%s1 + $0x8] sm:$0xff]
  %v13 = vld [vmem:[%s1 + $0x10] sm:$0xff]
  %v14 = vld [vmem:[%s1 + $0x18] sm:$0xff]
  %v15 = vld [vmem:[%s1 + $0x20] sm:$0xff]
  %v16 = vld [vmem:[%s1 + $0x28] sm:$0xff]
  %v17 = vld [vmem:[%s1 + $0x30] sm:$0xff]
  %v18 = vld [vmem:[%s1 + $0x38] sm:$0xff]
  %v19 = vld [vmem:[%s1 + $0x40] sm:$0xff]
  %v20 = vld [vmem:[%s1 + $0x48] sm:$0xff]
  %v21 = vld [vmem:[%s1 + $0x50] sm:$0xff]
  %v22 = vld [vmem:[%s1 + $0x58] sm:$0xff]
  %v23 = vld [vmem:[%s1 + $0x60] sm:$0xff]
  %v24 = vld [vmem:[%s1 + $0x68] sm:$0xff]
  %v25 = vld [vmem:[%s1 + $0x70] sm:$0xff]
  %v26 = vld [vmem:[%s1 + $0x78] sm:$0xff]
  %v27 = vld [vmem:[%s0] sm:$0xff]
  %v28 = vld [vmem:[%s0 + $0x8] sm:$0xff]
  %v29 = vld [vmem:[%s0 + $0x10] sm:$0xff]
  %v30 = vld [vmem:[%s0 + $0x18] sm:$0xff]
  %v31 = vadd.f32 %v11, %v12
  %32 = vadd.xlane.f32.xlu0 %v31
  %v33 = vpop.xlane.xlu0 %32
  %v34 = vadd.f32 %v13, %v14
  %35 = vadd.xlane.f32.xlu0 %v34
  %v36 = vpop.xlane.xlu0 %35
  %v37 = vadd.f32 %v15, %v16
  %38 = vadd.xlane.f32.xlu0 %v37
  %v39 = vpop.xlane.xlu0 %38
  %v40 = vadd.f32 %v17, %v18
  %41 = vadd.xlane.f32.xlu0 %v40
  %v42 = vpop.xlane.xlu0 %41
  %v43 = vadd.f32 %v19, %v20
  %44 = vadd.xlane.f32.xlu0 %v43
  %v45 = vpop.xlane.xlu0 %44
  %v46 = vadd.f32 %v21, %v22
  %47 = vadd.xlane.f32.xlu0 %v46
  %v48 = vpop.xlane.xlu0 %47
  %v49 = vadd.f32 %v23, %v24
  %50 = vadd.xlane.f32.xlu0 %v49
  %v51 = vpop.xlane.xlu0 %50
  %v52 = vadd.f32 %v25, %v26
  %53 = vadd.xlane.f32.xlu0 %v52
  %v54 = vpop.xlane.xlu0 %53
  %v55 = vmul.f32 %v33, 0.00390625
  %v56 = vmul.f32 %v36, 0.00390625
  %v57 = vmul.f32 %v39, 0.00390625
  %v58 = vmul.f32 %v42, 0.00390625
  %v59 = vmul.f32 %v45, 0.00390625
  %v60 = vmul.f32 %v48, 0.00390625
  %v61 = vmul.f32 %v51, 0.00390625
  %v62 = vmul.f32 %v54, 0.00390625
  %v63 = vmul.f32 %v55, %v27
  %v64 = vmul.f32 %v56, %v28
  %v65 = vmul.f32 %v57, %v29
  %v66 = vmul.f32 %v58, %v30
  %v67 = vmul.f32 %v59, %v27
  %v68 = vmul.f32 %v60, %v28
  %v69 = vmul.f32 %v61, %v29
  %v70 = vmul.f32 %v62, %v30
  %vm71 = vcmask 15360
  %v72 = vsel %vm71, %v63, 0.0
  %v73 = vsel %vm71, %v64, 0.0
  %v74 = vadd.f32 %v72, %v73
  %v75 = vsel %vm71, %v65, 0.0
  %v76 = vadd.f32 %v74, %v75
  %v77 = vsel %vm71, %v66, 0.0
  %v78 = vadd.f32 %v76, %v77
  %v79 = vrot.slane %v78, 4
  %v80 = vadd.f32 %v78, %v79
  %v81 = vrot.slane %v80, 2
  %v82 = vadd.f32 %v80, %v81
  %v83 = vrot.slane %v82, 1
  %v84 = vadd.f32 %v82, %v83
  %v85 = vsel %vm71, %v67, 0.0
  %v86 = vsel %vm71, %v68, 0.0
  %v87 = vadd.f32 %v85, %v86
  %v88 = vsel %vm71, %v69, 0.0
  %v89 = vadd.f32 %v87, %v88
  %v90 = vsel %vm71, %v70, 0.0
  %v91 = vadd.f32 %v89, %v90
  %v92 = vrot.slane %v91, 4
  %v93 = vadd.f32 %v91, %v92
  %v94 = vrot.slane %v93, 2
  %v95 = vadd.f32 %v93, %v94
  %v96 = vrot.slane %v95, 1
  %v97 = vadd.f32 %v95, %v96
  %v98 = vmax.f32 %v84, 0.0
  %v99 = vmax.f32 %v97, 0.0
  %102 = vrot.lane.b32.xlu0 %v98, 2
  %v103 = vpop.permute.xlu0 %102
  %104 = vrot.lane.b32.xlu0 %v99, 2
  %v105 = vpop.permute.xlu0 %104
  %v108 = vmul.f32 %v27, %v103
  %v109 = vmul.f32 %v28, %v103
  %v110 = vmul.f32 %v29, %v103
  %v111 = vmul.f32 %v30, %v103
  %v112 = vmul.f32 %v27, %v105
  %v113 = vmul.f32 %v28, %v105
  %v114 = vmul.f32 %v29, %v105
  %v115 = vmul.f32 %v30, %v105
  %124 = vrot.lane.b32.xlu0 %v108, 126
  %v125 = vpop.permute.xlu0 %124
  %126 = vrot.lane.b32.xlu0 %v109, 126
  %v127 = vpop.permute.xlu0 %126
  %128 = vrot.lane.b32.xlu0 %v110, 126
  %v129 = vpop.permute.xlu0 %128
  %130 = vrot.lane.b32.xlu0 %v111, 126
  %v131 = vpop.permute.xlu0 %130
  %132 = vrot.lane.b32.xlu0 %v112, 126
  %v133 = vpop.permute.xlu0 %132
  %134 = vrot.lane.b32.xlu0 %v113, 126
  %v135 = vpop.permute.xlu0 %134
  %136 = vrot.lane.b32.xlu0 %v114, 126
  %v137 = vpop.permute.xlu0 %136
  %138 = vrot.lane.b32.xlu0 %v115, 126
  %v139 = vpop.permute.xlu0 %138
  %v148 = vsel %vm71, %v125, 0.0
  %149 = vadd.xlane.f32.xlu0 %v148
  %v150 = vpop.xlane.xlu0 %149
  %v151 = vsel %vm71, %v127, 0.0
  %152 = vadd.xlane.f32.xlu0 %v151
  %v153 = vpop.xlane.xlu0 %152
  %v154 = vsel %vm71, %v129, 0.0
  %155 = vadd.xlane.f32.xlu0 %v154
  %v156 = vpop.xlane.xlu0 %155
  %v157 = vsel %vm71, %v131, 0.0
  %158 = vadd.xlane.f32.xlu0 %v157
  %v159 = vpop.xlane.xlu0 %158
  %v160 = vsel %vm71, %v133, 0.0
  %161 = vadd.xlane.f32.xlu0 %v160
  %v162 = vpop.xlane.xlu0 %161
  %v163 = vsel %vm71, %v135, 0.0
  %164 = vadd.xlane.f32.xlu0 %v163
  %v165 = vpop.xlane.xlu0 %164
  %v166 = vsel %vm71, %v137, 0.0
  %167 = vadd.xlane.f32.xlu0 %v166
  %v168 = vpop.xlane.xlu0 %167
  %v169 = vsel %vm71, %v139, 0.0
  %170 = vadd.xlane.f32.xlu0 %v169
  %v171 = vpop.xlane.xlu0 %170
  %v172 = vxor.u32 %v150, 2147483648
  %v173 = vxor.u32 %v153, 2147483648
  %v174 = vxor.u32 %v156, 2147483648
  %v175 = vxor.u32 %v159, 2147483648
  %v176 = vxor.u32 %v162, 2147483648
  %v177 = vxor.u32 %v165, 2147483648
  %v178 = vxor.u32 %v168, 2147483648
  %v179 = vxor.u32 %v171, 2147483648
  %v180 = vmul.f32 %v172, 1.442695
  %v181 = vpow.pop %v180
  %v182 = vmul.f32 %v173, 1.442695
  %v183 = vpow.pop %v182
  %v184 = vmul.f32 %v174, 1.442695
  %v185 = vpow.pop %v184
  %v186 = vmul.f32 %v175, 1.442695
  %v187 = vpow.pop %v186
  %v188 = vmul.f32 %v176, 1.442695
  %v189 = vpow.pop %v188
  %v190 = vmul.f32 %v177, 1.442695
  %v191 = vpow.pop %v190
  %v192 = vmul.f32 %v178, 1.442695
  %v193 = vpow.pop %v192
  %v194 = vmul.f32 %v179, 1.442695
  %v195 = vpow.pop %v194
  %v196 = vadd.f32 %v181, 1.0
  %v197 = vadd.f32 %v183, 1.0
  %v198 = vadd.f32 %v185, 1.0
  %v199 = vadd.f32 %v187, 1.0
  %v200 = vadd.f32 %v189, 1.0
  %v201 = vadd.f32 %v191, 1.0
  %v202 = vadd.f32 %v193, 1.0
  %v203 = vadd.f32 %v195, 1.0
  %v204 = vrcp.pop %v196
  %v205 = vmul.f32 %v196, %v204
  %v206 = vsub.f32 1.0, %v205
  %v207 = vmul.f32 %v204, %v206
  %v208 = vadd.f32 %v204, %v207
  %vm209 = vweird.f32 %v196
  %vm210 = vweird.f32 %v204
  %vm211 = vmor %vm209, %vm210
  %v212 = vsel %vm211, %v204, %v208
  %v213 = vand.u32 2147483647, %v196
  %vm214 = vcmp.eq.f32.partialorder %v213, 8.507059e+37
  %v215 = vand.u32 %v196, 2147483648
  %v216 = vor.u32 1.1754944e-38, %v215
  %v217 = vsel %vm214, %v216, %v212
  %v218 = vmul.f32 1.0, %v217
  %v219 = vrcp.pop %v197
  %v220 = vmul.f32 %v197, %v219
  %v221 = vsub.f32 1.0, %v220
  %v222 = vmul.f32 %v219, %v221
  %v223 = vadd.f32 %v219, %v222
  %vm224 = vweird.f32 %v197
  %vm225 = vweird.f32 %v219
  %vm226 = vmor %vm224, %vm225
  %v227 = vsel %vm226, %v219, %v223
  %v228 = vand.u32 2147483647, %v197
  %vm229 = vcmp.eq.f32.partialorder %v228, 8.507059e+37
  %v230 = vand.u32 %v197, 2147483648
  %v231 = vor.u32 1.1754944e-38, %v230
  %v232 = vsel %vm229, %v231, %v227
  %v233 = vmul.f32 1.0, %v232
  %v234 = vrcp.pop %v198
  %v235 = vmul.f32 %v198, %v234
  %v236 = vsub.f32 1.0, %v235
  %v237 = vmul.f32 %v234, %v236
  %v238 = vadd.f32 %v234, %v237
  %vm239 = vweird.f32 %v198
  %vm240 = vweird.f32 %v234
  %vm241 = vmor %vm239, %vm240
  %v242 = vsel %vm241, %v234, %v238
  %v243 = vand.u32 2147483647, %v198
  %vm244 = vcmp.eq.f32.partialorder %v243, 8.507059e+37
  %v245 = vand.u32 %v198, 2147483648
  %v246 = vor.u32 1.1754944e-38, %v245
  %v247 = vsel %vm244, %v246, %v242
  %v248 = vmul.f32 1.0, %v247
  %v249 = vrcp.pop %v199
  %v250 = vmul.f32 %v199, %v249
  %v251 = vsub.f32 1.0, %v250
  %v252 = vmul.f32 %v249, %v251
  %v253 = vadd.f32 %v249, %v252
  %vm254 = vweird.f32 %v199
  %vm255 = vweird.f32 %v249
  %vm256 = vmor %vm254, %vm255
  %v257 = vsel %vm256, %v249, %v253
  %v258 = vand.u32 2147483647, %v199
  %vm259 = vcmp.eq.f32.partialorder %v258, 8.507059e+37
  %v260 = vand.u32 %v199, 2147483648
  %v261 = vor.u32 1.1754944e-38, %v260
  %v262 = vsel %vm259, %v261, %v257
  %v263 = vmul.f32 1.0, %v262
  %v264 = vrcp.pop %v200
  %v265 = vmul.f32 %v200, %v264
  %v266 = vsub.f32 1.0, %v265
  %v267 = vmul.f32 %v264, %v266
  %v268 = vadd.f32 %v264, %v267
  %vm269 = vweird.f32 %v200
  %vm270 = vweird.f32 %v264
  %vm271 = vmor %vm269, %vm270
  %v272 = vsel %vm271, %v264, %v268
  %v273 = vand.u32 2147483647, %v200
  %vm274 = vcmp.eq.f32.partialorder %v273, 8.507059e+37
  %v275 = vand.u32 %v200, 2147483648
  %v276 = vor.u32 1.1754944e-38, %v275
  %v277 = vsel %vm274, %v276, %v272
  %v278 = vmul.f32 1.0, %v277
  %v279 = vrcp.pop %v201
  %v280 = vmul.f32 %v201, %v279
  %v281 = vsub.f32 1.0, %v280
  %v282 = vmul.f32 %v279, %v281
  %v283 = vadd.f32 %v279, %v282
  %vm284 = vweird.f32 %v201
  %vm285 = vweird.f32 %v279
  %vm286 = vmor %vm284, %vm285
  %v287 = vsel %vm286, %v279, %v283
  %v288 = vand.u32 2147483647, %v201
  %vm289 = vcmp.eq.f32.partialorder %v288, 8.507059e+37
  %v290 = vand.u32 %v201, 2147483648
  %v291 = vor.u32 1.1754944e-38, %v290
  %v292 = vsel %vm289, %v291, %v287
  %v293 = vmul.f32 1.0, %v292
  %v294 = vrcp.pop %v202
  %v295 = vmul.f32 %v202, %v294
  %v296 = vsub.f32 1.0, %v295
  %v297 = vmul.f32 %v294, %v296
  %v298 = vadd.f32 %v294, %v297
  %vm299 = vweird.f32 %v202
  %vm300 = vweird.f32 %v294
  %vm301 = vmor %vm299, %vm300
  %v302 = vsel %vm301, %v294, %v298
  %v303 = vand.u32 2147483647, %v202
  %vm304 = vcmp.eq.f32.partialorder %v303, 8.507059e+37
  %v305 = vand.u32 %v202, 2147483648
  %v306 = vor.u32 1.1754944e-38, %v305
  %v307 = vsel %vm304, %v306, %v302
  %v308 = vmul.f32 1.0, %v307
  %v309 = vrcp.pop %v203
  %v310 = vmul.f32 %v203, %v309
  %v311 = vsub.f32 1.0, %v310
  %v312 = vmul.f32 %v309, %v311
  %v313 = vadd.f32 %v309, %v312
  %vm314 = vweird.f32 %v203
  %vm315 = vweird.f32 %v309
  %vm316 = vmor %vm314, %vm315
  %v317 = vsel %vm316, %v309, %v313
  %v318 = vand.u32 2147483647, %v203
  %vm319 = vcmp.eq.f32.partialorder %v318, 8.507059e+37
  %v320 = vand.u32 %v203, 2147483648
  %v321 = vor.u32 1.1754944e-38, %v320
  %v322 = vsel %vm319, %v321, %v317
  %v323 = vmul.f32 1.0, %v322
  %v324 = vmul.f32 %v11, %v218
  %v325 = vmul.f32 %v12, %v218
  %v326 = vmul.f32 %v13, %v233
  %v327 = vmul.f32 %v14, %v233
  %v328 = vmul.f32 %v15, %v248
  %v329 = vmul.f32 %v16, %v248
  %v330 = vmul.f32 %v17, %v263
  %v331 = vmul.f32 %v18, %v263
  %v332 = vmul.f32 %v19, %v278
  %v333 = vmul.f32 %v20, %v278
  %v334 = vmul.f32 %v21, %v293
  %v335 = vmul.f32 %v22, %v293
  %v336 = vmul.f32 %v23, %v308
  %v337 = vmul.f32 %v24, %v308
  %v338 = vmul.f32 %v25, %v323
  %v339 = vmul.f32 %v26, %v323
  %340 = vst [vmem:[%s2] sm:$0xff] %v324
  %341 = vst [vmem:[%s2 + $0x8] sm:$0xff] %v325
  %342 = vst [vmem:[%s2 + $0x10] sm:$0xff] %v326
  %343 = vst [vmem:[%s2 + $0x18] sm:$0xff] %v327
  %344 = vst [vmem:[%s2 + $0x20] sm:$0xff] %v328
  %345 = vst [vmem:[%s2 + $0x28] sm:$0xff] %v329
  %346 = vst [vmem:[%s2 + $0x30] sm:$0xff] %v330
  %347 = vst [vmem:[%s2 + $0x38] sm:$0xff] %v331
  %348 = vst [vmem:[%s2 + $0x40] sm:$0xff] %v332
  %349 = vst [vmem:[%s2 + $0x48] sm:$0xff] %v333
  %350 = vst [vmem:[%s2 + $0x50] sm:$0xff] %v334
  %351 = vst [vmem:[%s2 + $0x58] sm:$0xff] %v335
  %352 = vst [vmem:[%s2 + $0x60] sm:$0xff] %v336
  %353 = vst [vmem:[%s2 + $0x68] sm:$0xff] %v337
  %354 = vst [vmem:[%s2 + $0x70] sm:$0xff] %v338
  %355 = vst [vmem:[%s2 + $0x78] sm:$0xff] %v339
  // Predicated region
  $region10: #{se_layer.1} parent=0 // pred_check
    _
  $region11: #{se_layer.1} parent=0 // pred_check_branch
    %357 = sbr.rel (0) target = $region13
  $region12: #{se_layer.1} parent=0 // pred_region
    _
  $region13: #{se_layer.1} parent=0 // pred_fallthru
    _
  // Predicated region
  $region14: #{se_layer.1} parent=0 // pred_check
    _
  $region15: #{se_layer.1} parent=0 // pred_check_branch
    %359 = sbr.rel (0) target = $region17
  $region16: #{se_layer.1} parent=0 // pred_region
    _
  $region17: #{se_layer.1} parent=0 // pred_fallthru
    _

</llo_original>
